<compile_context>
chip_gen: v7x
topology: tpu7x:2x2x1
jax: 0.10.0
libtpu: 0.0.40
codegen_flags: <defaults>
</compile_context>

<pallas_src>
from functools import partial

import jax
import jax.numpy as jnp
from jax.experimental import pallas as pl
from jax.experimental.pallas import tpu as pltpu


def _cdiv(a, b):
    return (a + b - 1) // b


def _round_up(x, m):
    return _cdiv(x, m) * m


def _choose_tiling(B, tile_b):
    """Pick (TB, B_pad, n_tiles).

    TB is a multiple of 128 (lane width), at most `tile_b`.  Whenever B > 128
    we guarantee n_tiles >= 2 so v7x's two TensorCores both get work (the grid
    axis is marked "parallel").
    """
    tile_b = max(128, _round_up(tile_b, 128))
    if B <= 128:
        TB = 128
    else:
        half = _round_up(_cdiv(B, 2), 128)   # two fat tiles for small/medium B
        TB = min(tile_b, half)
    B_pad = _round_up(B, TB)
    return TB, B_pad, B_pad // TB


def bpr_logsig_kernel(xu_ref, xi_ref, xj_ref, out_ref):
    # Blocks are (F, TB): factors on sublanes, batch on the 128-wide lane axis.
    # Inputs may be bf16; upcast on load (v5e has no bf16 VALU) — all math f32.
    xu = xu_ref[...].astype(jnp.float32)
    xi = xi_ref[...].astype(jnp.float32)
    xj = xj_ref[...].astype(jnp.float32)
    # Fused score: pos - neg = sum(xu * (xi - xj))  -> cheap sublane reduce.
    diff = jnp.sum(xu * (xi - xj), axis=0, keepdims=True)          # (1, TB)
    # numerically-stable logsigmoid(d) = min(d, 0) - log1p(exp(-|d|))
    out_ref[...] = jnp.minimum(diff, 0.0) - jnp.log1p(jnp.exp(-jnp.abs(diff)))


def bpr_loss_pallas(x_u, x_i, x_j, valid_b, tb):
    """x_u/x_i/x_j: (F, B_pad) lane-dense gathered embeddings (batch padded to
    a multiple of tb).  Only the first `valid_b` columns contribute."""
    F, B_pad = x_u.shape
    n_tiles = B_pad // tb
    itemsize = jnp.dtype(x_u.dtype).itemsize

    in_spec = pl.BlockSpec((F, tb), lambda i: (0, i))
    logsig = pl.pallas_call(
        bpr_logsig_kernel,
        out_shape=jax.ShapeDtypeStruct((1, B_pad), jnp.float32),
        grid_spec=pltpu.PrefetchScalarGridSpec(
            num_scalar_prefetch=0,
            grid=(n_tiles,),
            in_specs=[in_spec, in_spec, in_spec],
            out_specs=pl.BlockSpec((1, tb), lambda i: (0, i)),
        ),
        compiler_params=pltpu.CompilerParams(
            dimension_semantics=("parallel",),
        ),
        cost_estimate=pl.CostEstimate(
            flops=5 * B_pad * F,
            transcendentals=2 * B_pad,
            bytes_accessed=3 * B_pad * F * itemsize + B_pad * 4,
        ),
    )(x_u, x_i, x_j)

    # Padded columns (logsigmoid of garbage) are sliced off before the reduce;
    # the remaining (B,) reduce is tiny and left to XLA.
    return -jnp.sum(logsig[0, :valid_b])


@partial(jax.jit, static_argnames=("tile_b", "compute_dtype"))
def _bpr_forward(user_emb_t, item_emb_t, x, tile_b=16384,
                 compute_dtype=jnp.bfloat16):
    # user_emb_t: (F, n_users), item_emb_t: (F, n_items)  — transposed tables.
    # x: (3, B) int32 — [users, positive items, negative items]
    B = x.shape[1]
    TB, B_pad, _ = _choose_tiling(B, tile_b)
    # Pad only the tiny int index array (pad index 0 is always valid); the
    # gathers below then emit already-padded, lane-dense (F, B_pad) tensors —
    # no float transpose/pad pass over the gathered embeddings.
    x_pad = jnp.pad(x, ((0, 0), (0, B_pad - B)))
    x_u = jnp.take(user_emb_t, x_pad[0], axis=1).astype(compute_dtype)
    x_i = jnp.take(item_emb_t, x_pad[1], axis=1).astype(compute_dtype)
    x_j = jnp.take(item_emb_t, x_pad[2], axis=1).astype(compute_dtype)
    return bpr_loss_pallas(x_u, x_i, x_j, B, TB)


class MF_BP_ModelPallas:
    def __init__(self, n_users, n_items, n_factors=10, conv_depth=2,
                 l2_reg=0.01, key=None, compute_dtype=jnp.bfloat16,
                 tile_b=16384):
        self.n_users = n_users
        self.n_items = n_items
        self.n_factors = n_factors
        self.conv_depth = conv_depth
        self.l2_reg = l2_reg
        self.compute_dtype = compute_dtype
        self.tile_b = tile_b
        if key is None:
            key = jax.random.PRNGKey(0)
        ku, ki = jax.random.split(key)
        # xavier_normal_ init: std = sqrt(2 / (fan_in + fan_out)).
        # Tables are stored TRANSPOSED, (F, N): the column-gather in forward()
        # then directly produces the lane-dense (F, B) layout the kernel wants.
        std_u = (2.0 / (n_users + n_factors)) ** 0.5
        std_i = (2.0 / (n_items + n_factors)) ** 0.5
        self.user_embeddings_t = std_u * jax.random.normal(
            ku, (n_factors, n_users), dtype=jnp.float32)
        self.item_embeddings_t = std_i * jax.random.normal(
            ki, (n_factors, n_items), dtype=jnp.float32)

    def forward(self, x):
        return _bpr_forward(self.user_embeddings_t, self.item_embeddings_t, x,
                            tile_b=self.tile_b,
                            compute_dtype=self.compute_dtype)


def _reference_loss(user_emb_t, item_emb_t, x, gather_dtype=jnp.float32):
    """Pure-JAX reference (same math as the PyTorch module's forward)."""
    x_u = jnp.take(user_emb_t, x[0], axis=1).astype(gather_dtype).astype(jnp.float32)
    x_i = jnp.take(item_emb_t, x[1], axis=1).astype(gather_dtype).astype(jnp.float32)
    x_j = jnp.take(item_emb_t, x[2], axis=1).astype(gather_dtype).astype(jnp.float32)
    pos = jnp.sum(x_u * x_i, axis=0)
    neg = jnp.sum(x_u * x_j, axis=0)
    diff = pos - neg
    logsig = jnp.minimum(diff, 0.0) - jnp.log1p(jnp.exp(-jnp.abs(diff)))
    return -jnp.sum(logsig)


if __name__ == "__main__":
    key = jax.random.PRNGKey(0)
    n_users, n_items, n_factors = 32, 48, 10
    batch = 8

    model = MF_BP_ModelPallas(n_users, n_items, n_factors=n_factors, key=key)

    k_u, k_i, k_j = jax.random.split(jax.random.PRNGKey(1), 3)
    users = jax.random.randint(k_u, (batch,), 0, n_users, dtype=jnp.int32)
    pos_items = jax.random.randint(k_i, (batch,), 0, n_items, dtype=jnp.int32)
    neg_items = jax.random.randint(k_j, (batch,), 0, n_items, dtype=jnp.int32)
    x = jnp.stack([users, pos_items, neg_items], axis=0)  # (3, B)

    loss = jax.block_until_ready(model.forward(x))

    # Tight check against a reference fed the same bf16-rounded embeddings
    # (validates the kernel math exactly).
    ref_bf16 = jax.block_until_ready(_reference_loss(
        model.user_embeddings_t, model.item_embeddings_t, x,
        gather_dtype=jnp.bfloat16))
    assert jnp.allclose(loss, ref_bf16, rtol=1e-5, atol=1e-5), (loss, ref_bf16)

    # Loose sanity check against the full-f32 reference (bf16 input rounding
    # on length-10 dot products is negligible for the BPR loss).
    ref_f32 = jax.block_until_ready(_reference_loss(
        model.user_embeddings_t, model.item_embeddings_t, x,
        gather_dtype=jnp.float32))
    assert jnp.allclose(loss, ref_f32, rtol=5e-2, atol=1e-1), (loss, ref_f32)

    print("KERNEL_OK")
</pallas_src>

<mosaic_0001>
module attributes {stable_mosaic.version = 11 : i64} {
  func.func @bpr_logsig_kernel(%arg0: i32, %arg1: memref<10x128xbf16, #tpu.memory_space<vmem>>, %arg2: memref<10x128xbf16, #tpu.memory_space<vmem>>, %arg3: memref<10x128xbf16, #tpu.memory_space<vmem>>, %arg4: memref<1x128xf32, #tpu.memory_space<vmem>>) attributes {dimension_semantics = [#tpu.dimension_semantics<parallel>], iteration_bounds = array<i64: 1>, scalar_prefetch = 0 : i64, scratch_operands = 0 : i64, tpu.core_type = #tpu.core_type<tc>, window_params = [{transform_indices = @transform_0, window_bounds = array<i64: 10, 128>}, {transform_indices = @transform_1, window_bounds = array<i64: 10, 128>}, {transform_indices = @transform_2, window_bounds = array<i64: 10, 128>}, {transform_indices = @transform_3, window_bounds = array<i64: 1, 128>}]} {
    %c0 = arith.constant 0 : index
    %c0_0 = arith.constant 0 : index
    %0 = vector.load %arg1[%c0, %c0_0] : memref<10x128xbf16, #tpu.memory_space<vmem>>, vector<10x128xbf16>
    %1 = arith.extf %0 : vector<10x128xbf16> to vector<10x128xf32>
    %c0_1 = arith.constant 0 : index
    %c0_2 = arith.constant 0 : index
    %2 = vector.load %arg2[%c0_1, %c0_2] : memref<10x128xbf16, #tpu.memory_space<vmem>>, vector<10x128xbf16>
    %3 = arith.extf %2 : vector<10x128xbf16> to vector<10x128xf32>
    %c0_3 = arith.constant 0 : index
    %c0_4 = arith.constant 0 : index
    %4 = vector.load %arg3[%c0_3, %c0_4] : memref<10x128xbf16, #tpu.memory_space<vmem>>, vector<10x128xbf16>
    %5 = arith.extf %4 : vector<10x128xbf16> to vector<10x128xf32>
    %6 = arith.subf %3, %5 : vector<10x128xf32>
    %7 = arith.mulf %1, %6 : vector<10x128xf32>
    %cst = arith.constant dense<0.000000e+00> : vector<128xf32>
    %8 = vector.multi_reduction <add>, %7, %cst [0] : vector<10x128xf32> to vector<128xf32>
    %9 = vector.shape_cast %8 : vector<128xf32> to vector<1x128xf32>
    %cst_5 = arith.constant 0.000000e+00 : f32
    %10 = vector.broadcast %cst_5 : f32 to vector<1x128xf32>
    %11 = arith.minimumf %9, %10 : vector<1x128xf32>
    %12 = math.absf %9 : vector<1x128xf32>
    %cst_6 = arith.constant 0.000000e+00 : f32
    %13 = vector.broadcast %cst_6 : f32 to vector<1x128xf32>
    %14 = arith.subf %13, %12 : vector<1x128xf32>
    %15 = math.exp %14 : vector<1x128xf32>
    %16 = math.log1p %15 : vector<1x128xf32>
    %17 = arith.subf %11, %16 : vector<1x128xf32>
    %c0_7 = arith.constant 0 : index
    %c0_8 = arith.constant 0 : index
    %18 = vector.load %arg4[%c0_7, %c0_8] : memref<1x128xf32, #tpu.memory_space<vmem>>, vector<1x128xf32>
    tpu.vector_store %arg4[%c0_7, %c0_8], %17 {strides = array<i32>} : memref<1x128xf32, #tpu.memory_space<vmem>>, vector<1x128xf32>,
    return
  }
  func.func @transform_0(%arg0: i32) -> (i32, i32) {
    %c0_i32 = arith.constant 0 : i32
    %c0_i32_0 = arith.constant 0 : i32
    return %c0_i32, %arg0 : i32, i32
  }
  func.func @transform_1(%arg0: i32) -> (i32, i32) {
    %c0_i32 = arith.constant 0 : i32
    %c0_i32_0 = arith.constant 0 : i32
    return %c0_i32, %arg0 : i32, i32
  }
  func.func @transform_2(%arg0: i32) -> (i32, i32) {
    %c0_i32 = arith.constant 0 : i32
    %c0_i32_0 = arith.constant 0 : i32
    return %c0_i32, %arg0 : i32, i32
  }
  func.func @transform_3(%arg0: i32) -> (i32, i32) {
    %c0_i32 = arith.constant 0 : i32
    %c0_i32_0 = arith.constant 0 : i32
    return %c0_i32, %arg0 : i32, i32
  }
}

</mosaic_0001>

<llo_original>
// kernel: _bpr_forward.1
$region0: #{_bpr_forward.1}
  #allocation0 [shape = 'u32[]', space=smem, size = 0x4, offset = 0x4, fixed_abs, tag = 'smem constant byte address 0x4 - core index']
  #allocation1 [shape = 'u32[144,128]{1,0:T(1,128)}', space=vmem, size = 0x12000, scoped, tag = 'internal scratch']
  %s0 = inlined_call_operand.vmem [shape: bf16[10,128], index: 0, kind: input, shape index: {}]
  %s1 = inlined_call_operand.vmem [shape: bf16[10,128], index: 1, kind: input, shape index: {}]
  %s2 = inlined_call_operand.vmem [shape: bf16[10,128], index: 2, kind: input, shape index: {}]
  %s3 = inlined_call_operand.vmem [shape: f32[1,128], index: 3, kind: output, shape index: {}]
  %s4 = sld [smem:[#allocation0]]
  $region22: #{_bpr_forward.1} parent=0
    _
  %s6 = ssub.s32 1, %s4
  %s7 = scalar_select 0, %s6, %s4
  // Predicated region
  $region2: #{_bpr_forward.1} parent=0 // pred_check
    _
  $region3: #{_bpr_forward.1} parent=0 // pred_check_branch
    %9 = sbr.rel (0) target = $region5
  $region4: #{_bpr_forward.1} parent=0 // pred_region
    _
  $region5: #{_bpr_forward.1} parent=0 // pred_fallthru
    _
  // Predicated region
  $region6: #{_bpr_forward.1} parent=0 // pred_check
    _
  $region7: #{_bpr_forward.1} parent=0 // pred_check_branch
    %11 = sbr.rel (0) target = $region9
  $region8: #{_bpr_forward.1} parent=0 // pred_region
    _
  $region9: #{_bpr_forward.1} parent=0 // pred_fallthru
    _
  // Predicated region
  $region10: #{_bpr_forward.1} parent=0 // pred_check
    _
  $region11: #{_bpr_forward.1} parent=0 // pred_check_branch
    %13 = sbr.rel (0) target = $region13
  $region12: #{_bpr_forward.1} parent=0 // pred_region
    _
  $region13: #{_bpr_forward.1} parent=0 // pred_fallthru
    _
  %v14 = vld [vmem:[%s0] sm:$0xf]
  %v15 = vld [vmem:[%s0 + $0x4] sm:$0x1]
  %v16 = vunpack.c.l.bf16 %v14
  %v17 = vunpack.c.l.bf16 %v15
  %v18 = vld [vmem:[%s1] sm:$0xf]
  %v19 = vld [vmem:[%s1 + $0x4] sm:$0x1]
  %v20 = vunpack.c.l.bf16 %v18
  %v21 = vunpack.c.l.bf16 %v19
  %v22 = vld [vmem:[%s2] sm:$0xf]
  %v23 = vld [vmem:[%s2 + $0x4] sm:$0x1]
  %v24 = vunpack.c.l.bf16 %v22
  %v25 = vunpack.c.l.bf16 %v23
  %v26 = vsub.f32 %v20, %v24
  %v27 = vsub.f32 %v21, %v25
  %v28 = vmul.f32 %v16, %v26
  %v29 = vmul.f32 %v17, %v27
  %vm30 = vcmask 1041408
  %v31 = vsel %vm30, %v29, 0.0
  %v32 = vadd.f32 %v28, %v31
  %v33 = vrot.slane %v32, 4
  %v34 = vadd.f32 %v32, %v33
  %v35 = vrot.slane %v34, 2
  %v36 = vadd.f32 %v34, %v35
  %v37 = vrot.slane %v36, 1
  %v38 = vadd.f32 %v36, %v37
  %v39 = vmin.f32 %v38, 0.0
  %v40 = vand.u32 2147483647, %v38
  %v41 = vsub.f32 0.0, %v40
  %v42 = vmul.f32 %v41, 1.442695
  %v43 = vpow.pop %v42
  %v44 = vadd.f32 %v43, 1.0
  %v45 = vlog2.pop %v44
  %v46 = vmul.f32 %v45, 0.6931472
  %v47 = vmul.f32 -0.5, %v43
  %v48 = vadd.f32 %v47, 1.0
  %v49 = vmul.f32 %v48, %v43
  %v50 = vand.u32 2147483647, %v43
  %vm51 = vcmp.lt.f32.partialorder %v50, 0.0004427343
  %v52 = vsel %vm51, %v49, %v46
  %v53 = vsub.f32 %v39, %v52
  %54 = vst [vmem:[%s3] sm:$0x1] %v53
  // Predicated region
  $region14: #{_bpr_forward.1} parent=0 // pred_check
    _
  $region15: #{_bpr_forward.1} parent=0 // pred_check_branch
    %56 = sbr.rel (0) target = $region17
  $region16: #{_bpr_forward.1} parent=0 // pred_region
    _
  $region17: #{_bpr_forward.1} parent=0 // pred_fallthru
    _
  // Predicated region
  $region18: #{_bpr_forward.1} parent=0 // pred_check
    _
  $region19: #{_bpr_forward.1} parent=0 // pred_check_branch
    %58 = sbr.rel (0) target = $region21
  $region20: #{_bpr_forward.1} parent=0 // pred_region
    _
  $region21: #{_bpr_forward.1} parent=0 // pred_fallthru
    _

</llo_original>
